<compile_context>
chip_gen: v6e
topology: v6e:2x2x1
jax: 0.10.0
libtpu: 0.0.40
codegen_flags: <defaults>
</compile_context>

<pallas_src>
import functools

import jax
import jax.numpy as jnp
from jax.experimental import pallas as pl
from jax.experimental.pallas import tpu as pltpu

BN_EPS = 1e-5
P = 9                      # 3x3 output positions (3x3 input, pad=1, stride=1)
C_OUT = 128
K_IM2COL = 64 * 3 * 3      # 576
FC_IN = C_OUT * P          # 1152


def adv_clf_kernel(patches_ref, wconv_ref, params_ref, wfc_ref, out_ref, *,
                   batch, batch_pad):
    # patches_ref: (P*Bp, 576) bf16, row = p*Bp + b; rows with b >= batch are 0
    # wconv_ref:   (576, 128)  bf16
    # params_ref:  (3, 128)    f32   [gamma; beta; fc-bias in lanes 0..S-1]
    # wfc_ref:     (S, 1152)   bf16, wfc_ref[s, p*128 + c]
    # out_ref:     (batch, S)  f32
    S = out_ref.shape[1]
    Bp = batch_pad

    # ---- conv: ONE bf16 MXU matmul over all spatial positions & padded batch
    y = jnp.dot(patches_ref[...], wconv_ref[...],
                preferred_element_type=jnp.float32)            # (P*Bp, 128) f32

    # ---- BatchNorm2d, training-mode batch stats, single pass.
    # Padded batch rows produce exactly-zero conv outputs (zero patches, no
    # conv bias), so they add nothing to sum/sumsq; normalize by real count.
    inv_n = 1.0 / float(P * batch)
    mean = jnp.sum(y, axis=0, keepdims=True) * inv_n           # (1, 128)
    sumsq = jnp.sum(y * y, axis=0, keepdims=True) * inv_n      # (1, 128)
    var = sumsq - mean * mean
    inv = jax.lax.rsqrt(var + BN_EPS)
    scale = params_ref[0:1, :] * inv                           # gamma * inv
    shift = params_ref[1:2, :] - mean * scale                  # beta - mean*scale
    yn = y * scale + shift                                     # (P*Bp, 128)

    # ---- flatten (P*Bp,128) -> (Bp, P*128): each slice starts at a multiple
    # of 8 sublanes -> pure lane-block placement, no sublane shuffles.
    yflat = jnp.concatenate(
        [yn[p * Bp:(p + 1) * Bp, :] for p in range(P)], axis=1)  # (Bp, 1152)

    # ---- Linear(1152 -> S): bf16 matmul; rhs contracted on its last dim so
    # the tiny S dim never becomes the lane dim of a weight DMA.
    logits = jax.lax.dot_general(
        yflat.astype(jnp.bfloat16), wfc_ref[...],
        (((1,), (1,)), ((), ())),
        preferred_element_type=jnp.float32)                    # (Bp, S)
    logits = logits[:batch, :] + params_ref[2:3, :S]           # drop pad rows

    # ---- Softmax over dim=1 (EUP exp + approx reciprocal)
    m = jnp.max(logits, axis=1, keepdims=True)
    e = jnp.exp(logits - m)
    denom = jnp.sum(e, axis=1, keepdims=True)
    out_ref[...] = (e * pl.reciprocal(denom, approx=True)).astype(out_ref.dtype)


def prepare_params(wconv, bconv, gamma, beta, wfc, bfc):
    """One-time parameter relayout/cast, hoisted out of the per-call path.

    `bconv` is dropped: a channel-wise conv bias is cancelled exactly by
    training-mode BatchNorm's batch-mean subtraction.
    """
    del bconv
    S = wfc.shape[0]
    wconv_mat = wconv.reshape(C_OUT, K_IM2COL).T.astype(jnp.bfloat16)  # (576,128)
    # PyTorch flatten index = c*9 + p ; kernel flat index = p*128 + c
    wfc_re = jnp.transpose(wfc.reshape(S, C_OUT, P), (0, 2, 1)) \
        .reshape(S, FC_IN).astype(jnp.bfloat16)                         # (S,1152)
    params = jnp.zeros((3, 128), jnp.float32)
    params = params.at[0, :].set(gamma).at[1, :].set(beta).at[2, :S].set(bfc)
    return wconv_mat, wfc_re, params


@jax.jit
def adv_clf_forward(x, wconv_mat, wfc_re, params):
    """x: (B, 64, 3, 3) NCHW float32; weights from prepare_params()."""
    B = x.shape[0]
    S = wfc_re.shape[0]
    Bp = max(8, -(-B // 8) * 8)   # pad batch to sublane multiple

    # im2col (fuses under jit): pad batch with zero rows and spatially by 1.
    # Row layout: row = p*Bp + b with p = oh*3 + ow; column = c*9 + kh*3 + kw.
    xpad = jnp.pad(x, ((0, Bp - B), (0, 0), (1, 1), (1, 1)))   # (Bp, 64, 5, 5)
    patch_list = []
    for oh in range(3):
        for ow in range(3):
            patch_list.append(
                xpad[:, :, oh:oh + 3, ow:ow + 3].reshape(Bp, K_IM2COL))
    patches = jnp.stack(patch_list, axis=0).reshape(P * Bp, K_IM2COL)
    patches = patches.astype(jnp.bfloat16)

    flops = (2 * (P * Bp) * K_IM2COL * C_OUT + 2 * Bp * FC_IN * S
             + 16 * (P * Bp) * C_OUT)
    bytes_accessed = (2 * (P * Bp * K_IM2COL + K_IM2COL * C_OUT + S * FC_IN)
                      + 4 * (3 * 128 + B * S))
    cost = pl.CostEstimate(flops=flops, transcendentals=B * S + B + C_OUT,
                           bytes_accessed=bytes_accessed)

    vmem = pl.BlockSpec(memory_space=pltpu.MemorySpace.VMEM)
    kernel = functools.partial(adv_clf_kernel, batch=B, batch_pad=Bp)
    # TODO(synk): if B grows large, tile B with a ("parallel",) grid and a
    # two-pass BN (accumulate per-tile sum/sumsq, finalize + FC second pass)
    # so both v7x TensorCores get work and tiles respect per-generation VMEM.
    return pl.pallas_call(
        kernel,
        out_shape=jax.ShapeDtypeStruct((B, S), jnp.float32),
        in_specs=[vmem] * 4,
        out_specs=vmem,
        cost_estimate=cost,
    )(patches, wconv_mat, params, wfc_re)


def reference_forward(x, wconv, bconv, gamma, beta, wfc, bfc):
    """Pure-JAX f32 reference mirroring the PyTorch forward (training-mode BN)."""
    conv = jax.lax.conv_general_dilated(
        x, wconv, window_strides=(1, 1), padding=((1, 1), (1, 1)),
        dimension_numbers=("NCHW", "OIHW", "NCHW"))
    conv = conv + bconv.reshape(1, C_OUT, 1, 1)
    mean = conv.mean(axis=(0, 2, 3), keepdims=True)
    var = ((conv - mean) ** 2).mean(axis=(0, 2, 3), keepdims=True)
    y = (conv - mean) * jax.lax.rsqrt(var + BN_EPS)
    y = y * gamma.reshape(1, C_OUT, 1, 1) + beta.reshape(1, C_OUT, 1, 1)
    flat = y.reshape(x.shape[0], FC_IN)
    logits = flat @ wfc.T + bfc
    return jax.nn.softmax(logits, axis=1)


if __name__ == "__main__":
    B, C_IN, H, W = 2, 64, 3, 3          # Linear(1152) implies 3x3 spatial
    SUB_COUNT = 10

    key = jax.random.PRNGKey(0)
    kx, kw, kb, kg, kbe, kfw, kfb = jax.random.split(key, 7)

    x = jax.random.normal(kx, (B, C_IN, H, W), jnp.float32)
    wconv = jax.random.normal(kw, (C_OUT, C_IN, 3, 3), jnp.float32) * 0.05
    bconv = jax.random.normal(kb, (C_OUT,), jnp.float32) * 0.05
    gamma = 1.0 + 0.1 * jax.random.normal(kg, (C_OUT,), jnp.float32)
    beta = 0.1 * jax.random.normal(kbe, (C_OUT,), jnp.float32)
    wfc = jax.random.normal(kfw, (SUB_COUNT, FC_IN), jnp.float32) * 0.02
    bfc = jax.random.normal(kfb, (SUB_COUNT,), jnp.float32) * 0.02

    # one-time weight relayout / bf16 cast (outside the per-call path)
    wconv_mat, wfc_re, params = prepare_params(wconv, bconv, gamma, beta,
                                               wfc, bfc)

    out = adv_clf_forward(x, wconv_mat, wfc_re, params)
    out = jax.block_until_ready(out)

    ref = reference_forward(x, wconv, bconv, gamma, beta, wfc, bfc)
    assert out.shape == (B, SUB_COUNT)
    # bf16 MXU operands -> looser tolerance vs. the f32 reference
    assert jnp.allclose(out, ref, rtol=2e-2, atol=2e-2), (
        f"mismatch: max abs err {jnp.max(jnp.abs(out - ref))}")

    print("KERNEL_OK")
</pallas_src>

<mosaic_0001>
module attributes {stable_mosaic.version = 11 : i64} {
  func.func @adv_clf_kernel(%arg0: memref<72x576xbf16, #tpu.memory_space<vmem>>, %arg1: memref<576x128xbf16, #tpu.memory_space<vmem>>, %arg2: memref<3x128xf32, #tpu.memory_space<vmem>>, %arg3: memref<10x1152xbf16, #tpu.memory_space<vmem>>, %arg4: memref<2x10xf32, #tpu.memory_space<vmem>>) attributes {dimension_semantics = [], scalar_prefetch = 0 : i64, scratch_operands = 0 : i64, tpu.core_type = #tpu.core_type<tc>} {
    %c0 = arith.constant 0 : index
    %c0_0 = arith.constant 0 : index
    %0 = vector.load %arg0[%c0, %c0_0] : memref<72x576xbf16, #tpu.memory_space<vmem>>, vector<72x576xbf16>
    %c0_1 = arith.constant 0 : index
    %c0_2 = arith.constant 0 : index
    %1 = vector.load %arg1[%c0_1, %c0_2] : memref<576x128xbf16, #tpu.memory_space<vmem>>, vector<576x128xbf16>
    %cst = arith.constant dense<0.000000e+00> : vector<72x128xf32>
    %2 = tpu.matmul %0, %1, %cst {dimension_numbers = #tpu.dot_dimension_numbers<[1], [0], [0], [1], [0, 0, 1, 1], [], []>} : vector<72x576xbf16>, vector<576x128xbf16>, vector<72x128xf32> -> vector<72x128xf32>
    %cst_3 = arith.constant dense<0.000000e+00> : vector<128xf32>
    %3 = vector.multi_reduction <add>, %2, %cst_3 [0] : vector<72x128xf32> to vector<128xf32>
    %4 = vector.shape_cast %3 : vector<128xf32> to vector<1x128xf32>
    %cst_4 = arith.constant 0.055555556 : f32
    %5 = vector.broadcast %cst_4 : f32 to vector<1x128xf32>
    %6 = arith.mulf %4, %5 : vector<1x128xf32>
    %7 = arith.mulf %2, %2 : vector<72x128xf32>
    %cst_5 = arith.constant dense<0.000000e+00> : vector<128xf32>
    %8 = vector.multi_reduction <add>, %7, %cst_5 [0] : vector<72x128xf32> to vector<128xf32>
    %9 = vector.shape_cast %8 : vector<128xf32> to vector<1x128xf32>
    %cst_6 = arith.constant 0.055555556 : f32
    %10 = vector.broadcast %cst_6 : f32 to vector<1x128xf32>
    %11 = arith.mulf %9, %10 : vector<1x128xf32>
    %12 = arith.mulf %6, %6 : vector<1x128xf32>
    %13 = arith.subf %11, %12 : vector<1x128xf32>
    %cst_7 = arith.constant 9.99999974E-6 : f32
    %14 = vector.broadcast %cst_7 : f32 to vector<1x128xf32>
    %15 = arith.addf %13, %14 : vector<1x128xf32>
    %16 = math.rsqrt %15 : vector<1x128xf32>
    %c0_8 = arith.constant 0 : index
    %c0_9 = arith.constant 0 : index
    %17 = vector.load %arg2[%c0_8, %c0_9] : memref<3x128xf32, #tpu.memory_space<vmem>>, vector<1x128xf32>
    %18 = arith.mulf %17, %16 : vector<1x128xf32>
    %c1 = arith.constant 1 : index
    %c0_10 = arith.constant 0 : index
    %19 = vector.load %arg2[%c1, %c0_10] : memref<3x128xf32, #tpu.memory_space<vmem>>, vector<1x128xf32>
    %20 = arith.mulf %6, %18 : vector<1x128xf32>
    %21 = arith.subf %19, %20 : vector<1x128xf32>
    %22 = vector.broadcast %18 : vector<1x128xf32> to vector<72x128xf32>
    %23 = arith.mulf %2, %22 : vector<72x128xf32>
    %24 = vector.broadcast %21 : vector<1x128xf32> to vector<72x128xf32>
    %25 = arith.addf %23, %24 : vector<72x128xf32>
    %26 = vector.extract_strided_slice %25 {offsets = [0, 0], sizes = [8, 128], strides = [1, 1]} : vector<72x128xf32> to vector<8x128xf32>
    %27 = vector.extract_strided_slice %25 {offsets = [8, 0], sizes = [8, 128], strides = [1, 1]} : vector<72x128xf32> to vector<8x128xf32>
    %28 = vector.extract_strided_slice %25 {offsets = [16, 0], sizes = [8, 128], strides = [1, 1]} : vector<72x128xf32> to vector<8x128xf32>
    %29 = vector.extract_strided_slice %25 {offsets = [24, 0], sizes = [8, 128], strides = [1, 1]} : vector<72x128xf32> to vector<8x128xf32>
    %30 = vector.extract_strided_slice %25 {offsets = [32, 0], sizes = [8, 128], strides = [1, 1]} : vector<72x128xf32> to vector<8x128xf32>
    %31 = vector.extract_strided_slice %25 {offsets = [40, 0], sizes = [8, 128], strides = [1, 1]} : vector<72x128xf32> to vector<8x128xf32>
    %32 = vector.extract_strided_slice %25 {offsets = [48, 0], sizes = [8, 128], strides = [1, 1]} : vector<72x128xf32> to vector<8x128xf32>
    %33 = vector.extract_strided_slice %25 {offsets = [56, 0], sizes = [8, 128], strides = [1, 1]} : vector<72x128xf32> to vector<8x128xf32>
    %34 = vector.extract_strided_slice %25 {offsets = [64, 0], sizes = [8, 128], strides = [1, 1]} : vector<72x128xf32> to vector<8x128xf32>
    %35 = tpu.concatenate %26, %27, %28, %29, %30, %31, %32, %33, %34 in 1 : vector<8x128xf32>, vector<8x128xf32>, vector<8x128xf32>, vector<8x128xf32>, vector<8x128xf32>, vector<8x128xf32>, vector<8x128xf32>, vector<8x128xf32>, vector<8x128xf32> -> vector<8x1152xf32>
    %36 = arith.truncf %35 : vector<8x1152xf32> to vector<8x1152xbf16>
    %c0_11 = arith.constant 0 : index
    %c0_12 = arith.constant 0 : index
    %37 = vector.load %arg3[%c0_11, %c0_12] : memref<10x1152xbf16, #tpu.memory_space<vmem>>, vector<10x1152xbf16>
    %cst_13 = arith.constant dense<0.000000e+00> : vector<8x10xf32>
    %38 = tpu.matmul %36, %37, %cst_13 {dimension_numbers = #tpu.dot_dimension_numbers<[1], [1], [0], [0], [0, 0, 1, 0], [], []>} : vector<8x1152xbf16>, vector<10x1152xbf16>, vector<8x10xf32> -> vector<8x10xf32>
    %39 = vector.extract_strided_slice %38 {offsets = [0, 0], sizes = [2, 10], strides = [1, 1]} : vector<8x10xf32> to vector<2x10xf32>
    %c2 = arith.constant 2 : index
    %c0_14 = arith.constant 0 : index
    %40 = vector.load %arg2[%c2, %c0_14] : memref<3x128xf32, #tpu.memory_space<vmem>>, vector<1x10xf32>
    %41 = vector.broadcast %40 : vector<1x10xf32> to vector<2x10xf32>
    %42 = arith.addf %39, %41 : vector<2x10xf32>
    %cst_15 = arith.constant dense<0xFF800000> : vector<2xf32>
    %43 = vector.multi_reduction <maximumf>, %42, %cst_15 [1] : vector<2x10xf32> to vector<2xf32>
    %44 = vector.shape_cast %43 : vector<2xf32> to vector<2x1xf32>
    %45 = vector.broadcast %44 : vector<2x1xf32> to vector<2x10xf32>
    %46 = arith.subf %42, %45 : vector<2x10xf32>
    %47 = math.exp %46 : vector<2x10xf32>
    %cst_16 = arith.constant dense<0.000000e+00> : vector<2xf32>
    %48 = vector.multi_reduction <add>, %47, %cst_16 [1] : vector<2x10xf32> to vector<2xf32>
    %49 = vector.shape_cast %48 : vector<2xf32> to vector<2x1xf32>
    %50 = tpu.reciprocal %49 {approx = true} : vector<2x1xf32> -> vector<2x1xf32>
    %51 = vector.broadcast %50 : vector<2x1xf32> to vector<2x10xf32>
    %52 = arith.mulf %47, %51 : vector<2x10xf32>
    %c0_17 = arith.constant 0 : index
    %c0_18 = arith.constant 0 : index
    %53 = vector.load %arg4[%c0_17, %c0_18] : memref<2x10xf32, #tpu.memory_space<vmem>>, vector<2x10xf32>
    tpu.vector_store %arg4[%c0_17, %c0_18], %52 {strides = array<i32>} : memref<2x10xf32, #tpu.memory_space<vmem>>, vector<2x10xf32>,
    return
  }
}

</mosaic_0001>

<llo_original>
// kernel: adv_clf_forward.1
$region0: #{adv_clf_forward.1}
  #allocation0 [shape = 'u32[]', space=smem, size = 0x4, offset = 0x4, fixed_abs, tag = 'smem constant byte address 0x4 - core index']
  #allocation1 [shape = 'u32[144,128]{1,0:T(1,128)}', space=vmem, size = 0x12000, scoped, tag = 'internal scratch']
  %s0 = inlined_call_operand.vmem [shape: bf16[72,576], index: 0, kind: input, shape index: {}]
  %s1 = inlined_call_operand.vmem [shape: bf16[576,128], index: 1, kind: input, shape index: {}]
  %s2 = inlined_call_operand.vmem [shape: f32[3,128], index: 2, kind: input, shape index: {}]
  %s3 = inlined_call_operand.vmem [shape: bf16[10,1152], index: 3, kind: input, shape index: {}]
  %s4 = inlined_call_operand.hbm [shape: f32[2,10], index: 4, kind: output, shape index: {}]
  %s5 = sld [smem:[#allocation0]]
  $region26: #{adv_clf_forward.1} parent=0
    _
  %s7 = ssub.s32 1, %s5
  %s8 = scalar_select 0, %s7, %s5
  $region1: #{adv_clf_forward.1} parent=0
    #allocation2 [shape = 'u8[1024]{0}', space=vmem, size = 0x400, scoped, tag = 'output window, operand 0, single buffered']
    #allocation3 [shape = 's32[1]{0}', space=sflag, size = 0x4, scoped, tag = 'scoped memory for adv_clf_forward.1']
    %9 = vsyncpa [#allocation3], 0
    // Predicated region
    $region2: #{adv_clf_forward.1} parent=1 // pred_check
      _
    $region3: #{adv_clf_forward.1} parent=1 // pred_check_branch
      %11 = sbr.rel (0) target = $region5
    $region4: #{adv_clf_forward.1} parent=1 // pred_region
      _
    $region5: #{adv_clf_forward.1} parent=1 // pred_fallthru
      _
    // Predicated region
    $region6: #{adv_clf_forward.1} parent=1 // pred_check
      _
    $region7: #{adv_clf_forward.1} parent=1 // pred_check_branch
      %13 = sbr.rel (0) target = $region9
    $region8: #{adv_clf_forward.1} parent=1 // pred_region
      _
    $region9: #{adv_clf_forward.1} parent=1 // pred_fallthru
      _
    // Predicated region
    $region10: #{adv_clf_forward.1} parent=1 // pred_check
      _
    $region11: #{adv_clf_forward.1} parent=1 // pred_check_branch
      %15 = sbr.rel (0) target = $region13
    $region12: #{adv_clf_forward.1} parent=1 // pred_region
      _
    $region13: #{adv_clf_forward.1} parent=1 // pred_fallthru
      _
    // Predicated region
    $region14: #{adv_clf_forward.1} parent=1 // pred_check
      _
    $region15: #{adv_clf_forward.1} parent=1 // pred_check_branch
      %17 = sbr.rel (0) target = $region17
    $region16: #{adv_clf_forward.1} parent=1 // pred_region
      _
    $region17: #{adv_clf_forward.1} parent=1 // pred_fallthru
      _
    %v19 = vld [vmem:[%s0] sm:$0xff]
    %v20 = vld [vmem:[%s0 + $0x8] sm:$0xff]
    %v21 = vld [vmem:[%s0 + $0x10] sm:$0xf]
    %v22 = vld [vmem:[%s0 + $0x14] sm:$0xff]
    %v23 = vld [vmem:[%s0 + $0x1c] sm:$0xff]
    %v24 = vld [vmem:[%s0 + $0x24] sm:$0xf]
    %v25 = vld [vmem:[%s0 + $0x28] sm:$0xff]
    %v26 = vld [vmem:[%s0 + $0x30] sm:$0xff]
    %v27 = vld [vmem:[%s0 + $0x38] sm:$0xf]
    %v28 = vld [vmem:[%s0 + $0x3c] sm:$0xff]
    %v29 = vld [vmem:[%s0 + $0x44] sm:$0xff]
    %v30 = vld [vmem:[%s0 + $0x4c] sm:$0xf]
    %v31 = vld [vmem:[%s0 + $0x50] sm:$0xff]
    %v32 = vld [vmem:[%s0 + $0x58] sm:$0xff]
    %v33 = vld [vmem:[%s0 + $0x60] sm:$0xf]
    %v34 = vld [vmem:[%s0 + $0x64] sm:$0xff]
    %v35 = vld [vmem:[%s0 + $0x6c] sm:$0xff]
    %v36 = vld [vmem:[%s0 + $0x74] sm:$0xf]
    %v37 = vld [vmem:[%s0 + $0x78] sm:$0xff]
    %v38 = vld [vmem:[%s0 + $0x80] sm:$0xff]
    %v39 = vld [vmem:[%s0 + $0x88] sm:$0xf]
    %v40 = vld [vmem:[%s0 + $0x8c] sm:$0xff]
    %v41 = vld [vmem:[%s0 + $0x94] sm:$0xff]
    %v42 = vld [vmem:[%s0 + $0x9c] sm:$0xf]
    %v43 = vld [vmem:[%s0 + $0xa0] sm:$0xff]
    %v44 = vld [vmem:[%s0 + $0xa8] sm:$0xff]
    %v45 = vld [vmem:[%s0 + $0xb0] sm:$0xf]
    %v46 = vld [vmem:[%s1] sm:$0xf]
    %v47 = vld [vmem:[%s1 + $0x4] sm:$0xf]
    %v48 = vld [vmem:[%s1 + $0x8] sm:$0xf]
    %v49 = vld [vmem:[%s1 + $0xc] sm:$0xf]
    %v50 = vld [vmem:[%s1 + $0x10] sm:$0xf]
    %v51 = vld [vmem:[%s1 + $0x14] sm:$0xf]
    %v52 = vld [vmem:[%s1 + $0x18] sm:$0xf]
    %v53 = vld [vmem:[%s1 + $0x1c] sm:$0xf]
    %v54 = vld [vmem:[%s1 + $0x20] sm:$0xf]
    %v55 = vld [vmem:[%s1 + $0x24] sm:$0xf]
    %v56 = vld [vmem:[%s1 + $0x28] sm:$0xf]
    %v57 = vld [vmem:[%s1 + $0x2c] sm:$0xf]
    %v58 = vld [vmem:[%s1 + $0x30] sm:$0xf]
    %v59 = vld [vmem:[%s1 + $0x34] sm:$0xf]
    %v60 = vld [vmem:[%s1 + $0x38] sm:$0xf]
    %v61 = vld [vmem:[%s1 + $0x3c] sm:$0xf]
    %v62 = vld [vmem:[%s1 + $0x40] sm:$0xf]
    %v63 = vld [vmem:[%s1 + $0x44] sm:$0xf]
    %v64 = vld [vmem:[%s1 + $0x48] sm:$0xf]
    %v65 = vld [vmem:[%s1 + $0x4c] sm:$0xf]
    %v66 = vld [vmem:[%s1 + $0x50] sm:$0xf]
    %v67 = vld [vmem:[%s1 + $0x54] sm:$0xf]
    %v68 = vld [vmem:[%s1 + $0x58] sm:$0xf]
    %v69 = vld [vmem:[%s1 + $0x5c] sm:$0xf]
    %v70 = vld [vmem:[%s1 + $0x60] sm:$0xf]
    %v71 = vld [vmem:[%s1 + $0x64] sm:$0xf]
    %v72 = vld [vmem:[%s1 + $0x68] sm:$0xf]
    %v73 = vld [vmem:[%s1 + $0x6c] sm:$0xf]
    %v74 = vld [vmem:[%s1 + $0x70] sm:$0xf]
    %v75 = vld [vmem:[%s1 + $0x74] sm:$0xf]
    %v76 = vld [vmem:[%s1 + $0x78] sm:$0xf]
    %v77 = vld [vmem:[%s1 + $0x7c] sm:$0xf]
    %v78 = vld [vmem:[%s1 + $0x80] sm:$0xf]
    %v79 = vld [vmem:[%s1 + $0x84] sm:$0xf]
    %v80 = vld [vmem:[%s1 + $0x88] sm:$0xf]
    %v81 = vld [vmem:[%s1 + $0x8c] sm:$0xf]
    %v82 = vld [vmem:[%s1 + $0x90] sm:$0xf]
    %v83 = vld [vmem:[%s1 + $0x94] sm:$0xf]
    %v84 = vld [vmem:[%s1 + $0x98] sm:$0xf]
    %v85 = vld [vmem:[%s1 + $0x9c] sm:$0xf]
    %v86 = vld [vmem:[%s1 + $0xa0] sm:$0xf]
    %v87 = vld [vmem:[%s1 + $0xa4] sm:$0xf]
    %v88 = vld [vmem:[%s1 + $0xa8] sm:$0xf]
    %v89 = vld [vmem:[%s1 + $0xac] sm:$0xf]
    %v90 = vld [vmem:[%s1 + $0xb0] sm:$0xf]
    %v91 = vld [vmem:[%s1 + $0xb4] sm:$0xf]
    %v92 = vld [vmem:[%s1 + $0xb8] sm:$0xf]
    %v93 = vld [vmem:[%s1 + $0xbc] sm:$0xf]
    %v94 = vld [vmem:[%s1 + $0xc0] sm:$0xf]
    %v95 = vld [vmem:[%s1 + $0xc4] sm:$0xf]
    %v96 = vld [vmem:[%s1 + $0xc8] sm:$0xf]
    %v97 = vld [vmem:[%s1 + $0xcc] sm:$0xf]
    %v98 = vld [vmem:[%s1 + $0xd0] sm:$0xf]
    %v99 = vld [vmem:[%s1 + $0xd4] sm:$0xf]
    %v100 = vld [vmem:[%s1 + $0xd8] sm:$0xf]
    %v101 = vld [vmem:[%s1 + $0xdc] sm:$0xf]
    %v102 = vld [vmem:[%s1 + $0xe0] sm:$0xf]
    %v103 = vld [vmem:[%s1 + $0xe4] sm:$0xf]
    %v104 = vld [vmem:[%s1 + $0xe8] sm:$0xf]
    %v105 = vld [vmem:[%s1 + $0xec] sm:$0xf]
    %v106 = vld [vmem:[%s1 + $0xf0] sm:$0xf]
    %v107 = vld [vmem:[%s1 + $0xf4] sm:$0xf]
    %v108 = vld [vmem:[%s1 + $0xf8] sm:$0xf]
    %v109 = vld [vmem:[%s1 + $0xfc] sm:$0xf]
    %v110 = vld [vmem:[%s1 + $0x100] sm:$0xf]
    %v111 = vld [vmem:[%s1 + $0x104] sm:$0xf]
    %v112 = vld [vmem:[%s1 + $0x108] sm:$0xf]
    %v113 = vld [vmem:[%s1 + $0x10c] sm:$0xf]
    %v114 = vld [vmem:[%s1 + $0x110] sm:$0xf]
    %v115 = vld [vmem:[%s1 + $0x114] sm:$0xf]
    %v116 = vld [vmem:[%s1 + $0x118] sm:$0xf]
    %v117 = vld [vmem:[%s1 + $0x11c] sm:$0xf]
    %v145 = vunpack.c.l.b16 %v19
    %v146 = vunpack.c.h.b16 %v19
    %v147 = vunpack.c.l.b16 %v20
    %v148 = vunpack.c.h.b16 %v20
    %v149 = vunpack.c.l.b16 %v21
    %v150 = vunpack.c.l.b16 %v22
    %v151 = vunpack.c.h.b16 %v22
    %v152 = vunpack.c.l.b16 %v23
    %v153 = vunpack.c.h.b16 %v23
    %v154 = vunpack.c.l.b16 %v24
    %v155 = vunpack.c.l.b16 %v25
    %v156 = vunpack.c.h.b16 %v25
    %v157 = vunpack.c.l.b16 %v26
    %v158 = vunpack.c.h.b16 %v26
    %v159 = vunpack.c.l.b16 %v27
    %v160 = vunpack.c.l.b16 %v28
    %v161 = vunpack.c.h.b16 %v28
    %v162 = vunpack.c.l.b16 %v29
    %v163 = vunpack.c.h.b16 %v29
    %v164 = vunpack.c.l.b16 %v30
    %v165 = vunpack.c.l.b16 %v31
    %v166 = vunpack.c.h.b16 %v31
    %v167 = vunpack.c.l.b16 %v32
    %v168 = vunpack.c.h.b16 %v32
    %v169 = vunpack.c.l.b16 %v33
    %v170 = vunpack.c.l.b16 %v34
    %v171 = vunpack.c.h.b16 %v34
    %v172 = vunpack.c.l.b16 %v35
    %v173 = vunpack.c.h.b16 %v35
    %v174 = vunpack.c.l.b16 %v36
    %v175 = vunpack.c.l.b16 %v37
    %v176 = vunpack.c.h.b16 %v37
    %v177 = vunpack.c.l.b16 %v38
    %v178 = vunpack.c.h.b16 %v38
    %v179 = vunpack.c.l.b16 %v39
    %v180 = vunpack.c.l.b16 %v40
    %v181 = vunpack.c.h.b16 %v40
    %v182 = vunpack.c.l.b16 %v41
    %v183 = vunpack.c.h.b16 %v41
    %v184 = vunpack.c.l.b16 %v42
    %v185 = vunpack.c.l.b16 %v43
    %v186 = vunpack.c.h.b16 %v43
    %v187 = vunpack.c.l.b16 %v44
    %v188 = vunpack.c.h.b16 %v44
    %v189 = vunpack.c.l.b16 %v45
    %v190 = vpack.c.b16 %v150, %v145
    %v191 = vpack.c.b16 %v151, %v146
    %v192 = vpack.c.b16 %v152, %v147
    %v193 = vpack.c.b16 %v153, %v148
    %v194 = vpack.c.b16 %v154, %v149
    %v195 = vpack.c.b16 %v160, %v155
    %v196 = vpack.c.b16 %v161, %v156
    %v197 = vpack.c.b16 %v162, %v157
    %v198 = vpack.c.b16 %v163, %v158
    %v199 = vpack.c.b16 %v164, %v159
    %v200 = vpack.c.b16 %v170, %v165
    %v201 = vpack.c.b16 %v171, %v166
    %v202 = vpack.c.b16 %v172, %v167
    %v203 = vpack.c.b16 %v173, %v168
    %v204 = vpack.c.b16 %v174, %v169
    %v205 = vpack.c.b16 %v180, %v175
    %v206 = vpack.c.b16 %v181, %v176
    %v207 = vpack.c.b16 %v182, %v177
    %v208 = vpack.c.b16 %v183, %v178
    %v209 = vpack.c.b16 %v184, %v179
    %v210 = vpack.c.b16 %v185, %v185
    %v211 = vpack.c.b16 %v186, %v186
    %v212 = vpack.c.b16 %v187, %v187
    %v213 = vpack.c.b16 %v188, %v188
    %v214 = vpack.c.b16 %v189, %v189
    %v307 = vunpack.c.l.b16 %v46
    %v308 = vunpack.c.l.b16 %v47
    %v309 = vunpack.c.l.b16 %v48
    %v310 = vunpack.c.l.b16 %v49
    %v311 = vunpack.c.l.b16 %v50
    %v312 = vunpack.c.l.b16 %v51
    %v313 = vunpack.c.l.b16 %v52
    %v314 = vunpack.c.l.b16 %v53
    %v315 = vunpack.c.l.b16 %v54
    %v316 = vunpack.c.l.b16 %v55
    %v317 = vunpack.c.l.b16 %v56
    %v318 = vunpack.c.l.b16 %v57
    %v319 = vunpack.c.l.b16 %v58
    %v320 = vunpack.c.l.b16 %v59
    %v321 = vunpack.c.l.b16 %v60
    %v322 = vunpack.c.l.b16 %v61
    %v323 = vunpack.c.l.b16 %v62
    %v324 = vunpack.c.l.b16 %v63
    %v325 = vunpack.c.l.b16 %v64
    %v326 = vunpack.c.l.b16 %v65
    %v327 = vunpack.c.l.b16 %v66
    %v328 = vunpack.c.l.b16 %v67
    %v329 = vunpack.c.l.b16 %v68
    %v330 = vunpack.c.l.b16 %v69
    %v331 = vunpack.c.l.b16 %v70
    %v332 = vunpack.c.l.b16 %v71
    %v333 = vunpack.c.l.b16 %v72
    %v334 = vunpack.c.l.b16 %v73
    %v335 = vunpack.c.l.b16 %v74
    %v336 = vunpack.c.l.b16 %v75
    %v337 = vunpack.c.l.b16 %v76
    %v338 = vunpack.c.l.b16 %v77
    %v339 = vunpack.c.l.b16 %v78
    %v340 = vunpack.c.l.b16 %v79
    %v341 = vunpack.c.l.b16 %v80
    %v342 = vunpack.c.l.b16 %v81
    %v343 = vunpack.c.l.b16 %v82
    %v344 = vunpack.c.l.b16 %v83
    %v345 = vunpack.c.l.b16 %v84
    %v346 = vunpack.c.l.b16 %v85
    %v347 = vunpack.c.l.b16 %v86
    %v348 = vunpack.c.l.b16 %v87
    %v349 = vunpack.c.l.b16 %v88
    %v350 = vunpack.c.l.b16 %v89
    %v351 = vunpack.c.l.b16 %v90
    %v352 = vunpack.c.l.b16 %v91
    %v353 = vunpack.c.l.b16 %v92
    %v354 = vunpack.c.l.b16 %v93
    %v355 = vunpack.c.l.b16 %v94
    %v356 = vunpack.c.l.b16 %v95
    %v357 = vunpack.c.l.b16 %v96
    %v358 = vunpack.c.l.b16 %v97
    %v359 = vunpack.c.l.b16 %v98
    %v360 = vunpack.c.l.b16 %v99
    %v361 = vunpack.c.l.b16 %v100
    %v362 = vunpack.c.l.b16 %v101
    %v363 = vunpack.c.l.b16 %v102
    %v364 = vunpack.c.l.b16 %v103
    %v365 = vunpack.c.l.b16 %v104
    %v366 = vunpack.c.l.b16 %v105
    %v367 = vunpack.c.l.b16 %v106
    %v368 = vunpack.c.l.b16 %v107
    %v369 = vunpack.c.l.b16 %v108
    %v370 = vunpack.c.l.b16 %v109
    %v371 = vunpack.c.l.b16 %v110
    %v372 = vunpack.c.l.b16 %v111
    %v373 = vunpack.c.l.b16 %v112
    %v374 = vunpack.c.l.b16 %v113
    %v375 = vunpack.c.l.b16 %v114
    %v376 = vunpack.c.l.b16 %v115
    %v377 = vunpack.c.l.b16 %v116
    %v378 = vunpack.c.l.b16 %v117
    %v379 = vpack.c.b16 %v308, %v307
    %v380 = vpack.c.b16 %v310, %v309
    %v381 = vpack.c.b16 %v312, %v311
    %v382 = vpack.c.b16 %v314, %v313
    %v383 = vpack.c.b16 %v316, %v315
    %v384 = vpack.c.b16 %v318, %v317
    %v385 = vpack.c.b16 %v320, %v319
    %v386 = vpack.c.b16 %v322, %v321
    %v387 = vpack.c.b16 %v324, %v323
    %v388 = vpack.c.b16 %v326, %v325
    %v389 = vpack.c.b16 %v328, %v327
    %v390 = vpack.c.b16 %v330, %v329
    %v391 = vpack.c.b16 %v332, %v331
    %v392 = vpack.c.b16 %v334, %v333
    %v393 = vpack.c.b16 %v336, %v335
    %v394 = vpack.c.b16 %v338, %v337
    %v395 = vpack.c.b16 %v340, %v339
    %v396 = vpack.c.b16 %v342, %v341
    %v397 = vpack.c.b16 %v344, %v343
    %v398 = vpack.c.b16 %v346, %v345
    %v399 = vpack.c.b16 %v348, %v347
    %v400 = vpack.c.b16 %v350, %v349
    %v401 = vpack.c.b16 %v352, %v351
    %v402 = vpack.c.b16 %v354, %v353
    %v403 = vpack.c.b16 %v356, %v355
    %v404 = vpack.c.b16 %v358, %v357
    %v405 = vpack.c.b16 %v360, %v359
    %v406 = vpack.c.b16 %v362, %v361
    %v407 = vpack.c.b16 %v364, %v363
    %v408 = vpack.c.b16 %v366, %v365
    %v409 = vpack.c.b16 %v368, %v367
    %v410 = vpack.c.b16 %v370, %v369
    %v411 = vpack.c.b16 %v372, %v371
    %v412 = vpack.c.b16 %v374, %v373
    %v413 = vpack.c.b16 %v376, %v375
    %v414 = vpack.c.b16 %v378, %v377
    %vm451 = vcmask 523264
    %v453 = vsel %vm451, %v194, 0
    %v456 = vsel %vm451, %v199, 0
    %v459 = vsel %vm451, %v204, 0
    %v462 = vsel %vm451, %v209, 0
    %v465 = vsel %vm451, %v214, 0
    %467 = vmatprep.subr.bf16.mxu0 0
    %468 = vmatpush1.bf16.msra.mxu0 %v386
    %469 = vmatprep.subr.bf16.mxu0 0
    %470 = vmatpush1.bf16.msra.mxu0 %v385
    %471 = vmatprep.subr.bf16.mxu0 0
    %472 = vmatpush1.bf16.msra.mxu0 %v384
    %473 = vmatprep.subr.bf16.mxu0 0
    %474 = vmatpush1.bf16.msra.mxu0 %v383
    %475 = vmatprep.subr.bf16.mxu0 0
    %476 = vmatpush1.bf16.msra.mxu0 %v382
    %477 = vmatprep.subr.bf16.mxu0 0
    %478 = vmatpush1.bf16.msra.mxu0 %v381
    %479 = vmatprep.subr.bf16.mxu0 0
    %480 = vmatpush1.bf16.msra.mxu0 %v380
    %481 = vmatprep.subr.bf16.mxu0 0
    %482 = vmatpush1.bf16.msra.mxu0 %v379
    %483 = vmatprep.subr.bf16.mxu0 0
    %484 = vmatpush2.bf16.msra.mxu0 %v394
    %485 = vmatprep.subr.bf16.mxu0 0
    %486 = vmatpush2.bf16.msra.mxu0 %v393
    %487 = vmatprep.subr.bf16.mxu0 0
    %488 = vmatpush2.bf16.msra.mxu0 %v392
    %489 = vmatprep.subr.bf16.mxu0 0
    %490 = vmatpush2.bf16.msra.mxu0 %v391
    %491 = vmatprep.subr.bf16.mxu0 0
    %492 = vmatpush2.bf16.msra.mxu0 %v390
    %493 = vmatprep.subr.bf16.mxu0 0
    %494 = vmatpush2.bf16.msra.mxu0 %v389
    %495 = vmatprep.subr.bf16.mxu0 0
    %496 = vmatpush2.bf16.msra.mxu0 %v388
    %497 = vmatprep.subr.bf16.mxu0 0
    %498 = vmatpush2.bf16.msra.mxu0 %v387
    %499 = vmatprep.mubr.bf16.mxu0 %v191
    %500 = vmatmul.mubr.bf16.gmra.mxu0 %v190
    %v501 = vpop.f32.mrf.mxu0
    %v502 = vadd.f32 0.0, %v501
    %v503 = vpop.f32.mrf.mxu0
    %v504 = vpop.f32.mrf.mxu0
    %v505 = vadd.f32 0.0, %v504
    %v506 = vpop.f32.mrf.mxu0
    %507 = vmatprep.mubr.bf16.mxu0 %v196
    %508 = vmatmul.mubr.bf16.gmra.mxu0 %v195
    %v509 = vpop.f32.mrf.mxu0
    %v510 = vadd.f32 0.0, %v509
    %v511 = vpop.f32.mrf.mxu0
    %v512 = vpop.f32.mrf.mxu0
    %v513 = vadd.f32 0.0, %v512
    %v514 = vpop.f32.mrf.mxu0
    %515 = vmatprep.mubr.bf16.mxu0 %v201
    %516 = vmatmul.mubr.bf16.gmra.mxu0 %v200
    %v517 = vpop.f32.mrf.mxu0
    %v518 = vadd.f32 0.0, %v517
    %v519 = vpop.f32.mrf.mxu0
    %v520 = vpop.f32.mrf.mxu0
    %v521 = vadd.f32 0.0, %v520
    %v522 = vpop.f32.mrf.mxu0
    %523 = vmatprep.mubr.bf16.mxu0 %v206
    %524 = vmatmul.mubr.bf16.gmra.mxu0 %v205
    %v525 = vpop.f32.mrf.mxu0
    %v526 = vadd.f32 0.0, %v525
    %v527 = vpop.f32.mrf.mxu0
    %v528 = vpop.f32.mrf.mxu0
    %v529 = vadd.f32 0.0, %v528
    %v530 = vpop.f32.mrf.mxu0
    %531 = vmatprep.mubr.bf16.mxu0 %v211
    %532 = vmatmul.mubr.bf16.gmra.mxu0 %v210
    %v533 = vpop.f32.mrf.mxu0
    %v534 = vadd.f32 0.0, %v533
    %v535 = vpop.f32.mrf.mxu0
    %v536 = vpop.f32.mrf.mxu0
    %v537 = vpop.f32.mrf.mxu0
    %538 = vdwg.mxu0
    %539 = vmatprep.subr.bf16.mxu0 0
    %540 = vmatpush1.bf16.msra.mxu0 %v402
    %541 = vmatprep.subr.bf16.mxu0 0
    %542 = vmatpush1.bf16.msra.mxu0 %v401
    %543 = vmatprep.subr.bf16.mxu0 0
    %544 = vmatpush1.bf16.msra.mxu0 %v400
    %545 = vmatprep.subr.bf16.mxu0 0
    %546 = vmatpush1.bf16.msra.mxu0 %v399
    %547 = vmatprep.subr.bf16.mxu0 0
    %548 = vmatpush1.bf16.msra.mxu0 %v398
    %549 = vmatprep.subr.bf16.mxu0 0
    %550 = vmatpush1.bf16.msra.mxu0 %v397
    %551 = vmatprep.subr.bf16.mxu0 0
    %552 = vmatpush1.bf16.msra.mxu0 %v396
    %553 = vmatprep.subr.bf16.mxu0 0
    %554 = vmatpush1.bf16.msra.mxu0 %v395
    %555 = vmatprep.subr.bf16.mxu0 0
    %556 = vmatpush2.bf16.msra.mxu0 %v410
    %557 = vmatprep.subr.bf16.mxu0 0
    %558 = vmatpush2.bf16.msra.mxu0 %v409
    %559 = vmatprep.subr.bf16.mxu0 0
    %560 = vmatpush2.bf16.msra.mxu0 %v408
    %561 = vmatprep.subr.bf16.mxu0 0
    %562 = vmatpush2.bf16.msra.mxu0 %v407
    %563 = vmatprep.subr.bf16.mxu0 0
    %564 = vmatpush2.bf16.msra.mxu0 %v406
    %565 = vmatprep.subr.bf16.mxu0 0
    %566 = vmatpush2.bf16.msra.mxu0 %v405
    %567 = vmatprep.subr.bf16.mxu0 0
    %568 = vmatpush2.bf16.msra.mxu0 %v404
    %569 = vmatprep.subr.bf16.mxu0 0
    %570 = vmatpush2.bf16.msra.mxu0 %v403
    %571 = vmatprep.mubr.bf16.mxu0 %v193
    %572 = vmatmul.mubr.bf16.gmra.mxu0 %v192
    %v573 = vpop.f32.mrf.mxu0
    %v574 = vadd.f32 %v502, %v573
    %v575 = vpop.f32.mrf.mxu0
    %v576 = vpop.f32.mrf.mxu0
    %v577 = vadd.f32 %v505, %v576
    %v578 = vpop.f32.mrf.mxu0
    %579 = vmatprep.mubr.bf16.mxu0 %v198
    %580 = vmatmul.mubr.bf16.gmra.mxu0 %v197
    %v581 = vpop.f32.mrf.mxu0
    %v582 = vadd.f32 %v510, %v581
    %v583 = vpop.f32.mrf.mxu0
    %v584 = vpop.f32.mrf.mxu0
    %v585 = vadd.f32 %v513, %v584
    %v586 = vpop.f32.mrf.mxu0
    %587 = vmatprep.mubr.bf16.mxu0 %v203
    %588 = vmatmul.mubr.bf16.gmra.mxu0 %v202
    %v589 = vpop.f32.mrf.mxu0
    %v590 = vadd.f32 %v518, %v589
    %v591 = vpop.f32.mrf.mxu0
    %v592 = vpop.f32.mrf.mxu0
    %v593 = vadd.f32 %v521, %v592
    %v594 = vpop.f32.mrf.mxu0
    %595 = vmatprep.mubr.bf16.mxu0 %v208
    %596 = vmatmul.mubr.bf16.gmra.mxu0 %v207
    %v597 = vpop.f32.mrf.mxu0
    %v598 = vadd.f32 %v526, %v597
    %v599 = vpop.f32.mrf.mxu0
    %v600 = vpop.f32.mrf.mxu0
    %v601 = vadd.f32 %v529, %v600
    %v602 = vpop.f32.mrf.mxu0
    %603 = vmatprep.mubr.bf16.mxu0 %v213
    %604 = vmatmul.mubr.bf16.gmra.mxu0 %v212
    %v605 = vpop.f32.mrf.mxu0
    %v606 = vadd.f32 %v534, %v605
    %v607 = vpop.f32.mrf.mxu0
    %v608 = vpop.f32.mrf.mxu0
    %v609 = vpop.f32.mrf.mxu0
    %610 = vdwg.mxu0
    %611 = vmatprep.subr.bf16.mxu0 0
    %612 = vmatpush1.bf16.msra.mxu0 0
    %613 = vmatprep.subr.bf16.mxu0 0
    %614 = vmatpush1.bf16.msra.mxu0 0
    %615 = vmatprep.subr.bf16.mxu0 0
    %616 = vmatpush1.bf16.msra.mxu0 0
    %617 = vmatprep.subr.bf16.mxu0 0
    %618 = vmatpush1.bf16.msra.mxu0 0
    %619 = vmatprep.subr.bf16.mxu0 0
    %620 = vmatpush1.bf16.msra.mxu0 %v414
    %621 = vmatprep.subr.bf16.mxu0 0
    %622 = vmatpush1.bf16.msra.mxu0 %v413
    %623 = vmatprep.subr.bf16.mxu0 0
    %624 = vmatpush1.bf16.msra.mxu0 %v412
    %625 = vmatprep.subr.bf16.mxu0 0
    %626 = vmatpush1.bf16.msra.mxu0 %v411
    %627 = vmatprep.subr.bf16.mxu0 0
    %628 = vmatpush2.bf16.msra.mxu0 0
    %629 = vmatprep.subr.bf16.mxu0 0
    %630 = vmatpush2.bf16.msra.mxu0 0
    %631 = vmatprep.subr.bf16.mxu0 0
    %632 = vmatpush2.bf16.msra.mxu0 0
    %633 = vmatprep.subr.bf16.mxu0 0
    %634 = vmatpush2.bf16.msra.mxu0 0
    %635 = vmatprep.subr.bf16.mxu0 0
    %636 = vmatpush2.bf16.msra.mxu0 0
    %637 = vmatprep.subr.bf16.mxu0 0
    %638 = vmatpush2.bf16.msra.mxu0 0
    %639 = vmatprep.subr.bf16.mxu0 0
    %640 = vmatpush2.bf16.msra.mxu0 0
    %641 = vmatprep.subr.bf16.mxu0 0
    %642 = vmatpush2.bf16.msra.mxu0 0
    %643 = vmatprep.mubr.bf16.mxu0 0
    %644 = vmatmul.mubr.bf16.gmra.mxu0 %v453
    %v645 = vpop.f32.mrf.mxu0
    %v646 = vadd.f32 %v574, %v645
    %v647 = vpop.f32.mrf.mxu0
    %v648 = vpop.f32.mrf.mxu0
    %v649 = vadd.f32 %v577, %v648
    %v650 = vpop.f32.mrf.mxu0
    %651 = vmatprep.mubr.bf16.mxu0 0
    %652 = vmatmul.mubr.bf16.gmra.mxu0 %v456
    %v653 = vpop.f32.mrf.mxu0
    %v654 = vadd.f32 %v582, %v653
    %v655 = vpop.f32.mrf.mxu0
    %v656 = vpop.f32.mrf.mxu0
    %v657 = vadd.f32 %v585, %v656
    %v658 = vpop.f32.mrf.mxu0
    %659 = vmatprep.mubr.bf16.mxu0 0
    %660 = vmatmul.mubr.bf16.gmra.mxu0 %v459
    %v661 = vpop.f32.mrf.mxu0
    %v662 = vadd.f32 %v590, %v661
    %v663 = vpop.f32.mrf.mxu0
    %v664 = vpop.f32.mrf.mxu0
    %v665 = vadd.f32 %v593, %v664
    %v666 = vpop.f32.mrf.mxu0
    %667 = vmatprep.mubr.bf16.mxu0 0
    %668 = vmatmul.mubr.bf16.gmra.mxu0 %v462
    %v669 = vpop.f32.mrf.mxu0
    %v670 = vadd.f32 %v598, %v669
    %v671 = vpop.f32.mrf.mxu0
    %v672 = vpop.f32.mrf.mxu0
    %v673 = vadd.f32 %v601, %v672
    %v674 = vpop.f32.mrf.mxu0
    %675 = vmatprep.mubr.bf16.mxu0 0
    %676 = vmatmul.mubr.bf16.gmra.mxu0 %v465
    %v677 = vpop.f32.mrf.mxu0
    %v678 = vadd.f32 %v606, %v677
    %v679 = vpop.f32.mrf.mxu0
    %v680 = vpop.f32.mrf.mxu0
    %v681 = vpop.f32.mrf.mxu0
    %682 = vdwg.mxu0
    %v683 = vadd.f32 %v646, %v649
    %v684 = vadd.f32 %v683, %v654
    %v685 = vadd.f32 %v684, %v657
    %v686 = vadd.f32 %v685, %v662
    %v687 = vadd.f32 %v686, %v665
    %v688 = vadd.f32 %v687, %v670
    %v689 = vadd.f32 %v688, %v673
    %v690 = vadd.f32 %v689, %v678
    %v691 = vrot.slane %v690, 4
    %v692 = vadd.f32 %v690, %v691
    %v693 = vrot.slane %v692, 2
    %v694 = vadd.f32 %v692, %v693
    %v695 = vrot.slane %v694, 1
    %v696 = vadd.f32 %v694, %v695
    %v697 = vmul.f32 %v696, 0.055555556
    %v698 = vmul.f32 %v646, %v646
    %v699 = vmul.f32 %v649, %v649
    %v700 = vmul.f32 %v654, %v654
    %v701 = vmul.f32 %v657, %v657
    %v702 = vmul.f32 %v662, %v662
    %v703 = vmul.f32 %v665, %v665
    %v704 = vmul.f32 %v670, %v670
    %v705 = vmul.f32 %v673, %v673
    %v706 = vmul.f32 %v678, %v678
    %v707 = vadd.f32 %v698, %v699
    %v708 = vadd.f32 %v707, %v700
    %v709 = vadd.f32 %v708, %v701
    %v710 = vadd.f32 %v709, %v702
    %v711 = vadd.f32 %v710, %v703
    %v712 = vadd.f32 %v711, %v704
    %v713 = vadd.f32 %v712, %v705
    %v714 = vadd.f32 %v713, %v706
    %v715 = vrot.slane %v714, 4
    %v716 = vadd.f32 %v714, %v715
    %v717 = vrot.slane %v716, 2
    %v718 = vadd.f32 %v716, %v717
    %v719 = vrot.slane %v718, 1
    %v720 = vadd.f32 %v718, %v719
    %v721 = vmul.f32 %v720, 0.055555556
    %v722 = vmul.f32 %v697, %v697
    %v723 = vsub.f32 %v721, %v722
    %v724 = vadd.f32 %v723, 1e-05
    %v725 = vrsqrt.pop %v724
    %v726 = vld [vmem:[%s2] sm:$0x1]
    %v727 = vmul.f32 %v726, %v725
    %v728 = vld [vmem:[%s2 + $0x1] sm:$0x1]
    %v729 = vmul.f32 %v697, %v727
    %v730 = vsub.f32 %v728, %v729
    %v731 = vlaneseq
    %v732 = vshrl.u32 %v731, 7
    %v733 = vsub.s32 0, %v732
    %v734 = vrot.slane %v727, %v733
    %v735 = vmul.f32 %v646, %v734
    %v736 = vmul.f32 %v649, %v734
    %v737 = vmul.f32 %v654, %v734
    %v738 = vmul.f32 %v657, %v734
    %v739 = vmul.f32 %v662, %v734
    %v740 = vmul.f32 %v665, %v734
    %v741 = vmul.f32 %v670, %v734
    %v742 = vmul.f32 %v673, %v734
    %v743 = vmul.f32 %v678, %v734
    %v744 = vlaneseq
    %v745 = vshrl.u32 %v744, 7
    %v746 = vsub.s32 0, %v745
    %v747 = vrot.slane %v730, %v746
    %v748 = vadd.f32 %v735, %v747
    %v749 = vadd.f32 %v736, %v747
    %v750 = vadd.f32 %v737, %v747
    %v751 = vadd.f32 %v738, %v747
    %v752 = vadd.f32 %v739, %v747
    %v753 = vadd.f32 %v740, %v747
    %v754 = vadd.f32 %v741, %v747
    %v755 = vadd.f32 %v742, %v747
    %v756 = vadd.f32 %v743, %v747
    %v757 = vpack.c.bf16 %v748, %v748
    %v758 = vpack.c.bf16 %v749, %v749
    %v759 = vpack.c.bf16 %v750, %v750
    %v760 = vpack.c.bf16 %v751, %v751
    %v761 = vpack.c.bf16 %v752, %v752
    %v762 = vpack.c.bf16 %v753, %v753
    %v763 = vpack.c.bf16 %v754, %v754
    %v764 = vpack.c.bf16 %v755, %v755
    %v765 = vpack.c.bf16 %v756, %v756
    %v766 = vld [vmem:[%s3] sm:$0xff]
    %v767 = vld [vmem:[%s3 + $0x8] sm:$0xff]
    %v768 = vld [vmem:[%s3 + $0x10] sm:$0xff]
    %v769 = vld [vmem:[%s3 + $0x18] sm:$0xff]
    %v770 = vld [vmem:[%s3 + $0x20] sm:$0xf]
    %v771 = vld [vmem:[%s3 + $0x24] sm:$0x11]
    %v772 = vld [vmem:[%s3 + $0x2c] sm:$0x11]
    %v773 = vld [vmem:[%s3 + $0x34] sm:$0x11]
    %v774 = vld [vmem:[%s3 + $0x3c] sm:$0x11]
    %v775 = vld [vmem:[%s3 + $0x44] sm:$0x1]
    %v786 = vunpack.c.l.b16 %v766
    %v787 = vunpack.c.h.b16 %v766
    %v788 = vunpack.c.l.b16 %v767
    %v789 = vunpack.c.h.b16 %v767
    %v790 = vunpack.c.l.b16 %v768
    %v791 = vunpack.c.h.b16 %v768
    %v792 = vunpack.c.l.b16 %v769
    %v793 = vunpack.c.h.b16 %v769
    %v794 = vunpack.c.l.b16 %v770
    %v795 = vunpack.c.l.b16 %v771
    %v796 = vunpack.c.h.b16 %v771
    %v797 = vunpack.c.l.b16 %v772
    %v798 = vunpack.c.h.b16 %v772
    %v799 = vunpack.c.l.b16 %v773
    %v800 = vunpack.c.h.b16 %v773
    %v801 = vunpack.c.l.b16 %v774
    %v802 = vunpack.c.h.b16 %v774
    %v803 = vunpack.c.l.b16 %v775
    %v804 = vpack.c.b16 %v795, %v786
    %v805 = vpack.c.b16 %v796, %v787
    %v806 = vpack.c.b16 %v797, %v788
    %v807 = vpack.c.b16 %v798, %v789
    %v808 = vpack.c.b16 %v799, %v790
    %v809 = vpack.c.b16 %v800, %v791
    %v810 = vpack.c.b16 %v801, %v792
    %v811 = vpack.c.b16 %v802, %v793
    %v812 = vpack.c.b16 %v803, %v794
    %822 = vmatprep.subr.bf16.mxu0 0
    %823 = vmatpush1.bf16.xpose.msra.mxu0 0
    %824 = vmatprep.subr.bf16.mxu0 0
    %825 = vmatpush1.bf16.xpose.msra.mxu0 0
    %826 = vmatprep.subr.bf16.mxu0 0
    %827 = vmatpush1.bf16.xpose.msra.mxu0 0
    %828 = vmatprep.subr.bf16.mxu0 0
    %829 = vmatpush1.bf16.xpose.msra.mxu0 0
    %830 = vmatprep.subr.bf16.mxu0 0
    %831 = vmatpush1.bf16.xpose.msra.mxu0 0
    %832 = vmatprep.subr.bf16.mxu0 0
    %833 = vmatpush1.bf16.xpose.msra.mxu0 0
    %834 = vmatprep.subr.bf16.mxu0 0
    %835 = vmatpush1.bf16.xpose.msra.mxu0 0
    %836 = vmatprep.subr.bf16.mxu0 %v805
    %837 = vmatpush1.bf16.xpose.msra.mxu0 %v804
    %838 = vmatprep.subr.bf16.mxu0 0
    %839 = vmatpush2.bf16.xpose.msra.mxu0 0
    %840 = vmatprep.subr.bf16.mxu0 0
    %841 = vmatpush2.bf16.xpose.msra.mxu0 0
    %842 = vmatprep.subr.bf16.mxu0 0
    %843 = vmatpush2.bf16.xpose.msra.mxu0 0
    %844 = vmatprep.subr.bf16.mxu0 0
    %845 = vmatpush2.bf16.xpose.msra.mxu0 0
    %846 = vmatprep.subr.bf16.mxu0 0
    %847 = vmatpush2.bf16.xpose.msra.mxu0 0
    %848 = vmatprep.subr.bf16.mxu0 0
    %849 = vmatpush2.bf16.xpose.msra.mxu0 0
    %850 = vmatprep.subr.bf16.mxu0 0
    %851 = vmatpush2.bf16.xpose.msra.mxu0 0
    %852 = vmatprep.subr.bf16.mxu0 0
    %853 = vmatpush2.bf16.xpose.msra.mxu0 0
    %854 = vmatprep.mubr.bf16.mxu0 %v758
    %855 = vmatmul.mubr.bf16.gmra.mxu0 %v757
    %v856 = vpop.f32.mrf.mxu0
    %v857 = vadd.f32 0.0, %v856
    %v858 = vpop.f32.mrf.mxu0
    %v859 = vpop.f32.mrf.mxu0
    %v860 = vpop.f32.mrf.mxu0
    %861 = vdwg.mxu0
    %862 = vmatprep.subr.bf16.mxu0 0
    %863 = vmatpush1.bf16.xpose.msra.mxu0 0
    %864 = vmatprep.subr.bf16.mxu0 0
    %865 = vmatpush1.bf16.xpose.msra.mxu0 0
    %866 = vmatprep.subr.bf16.mxu0 0
    %867 = vmatpush1.bf16.xpose.msra.mxu0 0
    %868 = vmatprep.subr.bf16.mxu0 0
    %869 = vmatpush1.bf16.xpose.msra.mxu0 0
    %870 = vmatprep.subr.bf16.mxu0 0
    %871 = vmatpush1.bf16.xpose.msra.mxu0 0
    %872 = vmatprep.subr.bf16.mxu0 0
    %873 = vmatpush1.bf16.xpose.msra.mxu0 0
    %874 = vmatprep.subr.bf16.mxu0 0
    %875 = vmatpush1.bf16.xpose.msra.mxu0 0
    %876 = vmatprep.subr.bf16.mxu0 %v807
    %877 = vmatpush1.bf16.xpose.msra.mxu0 %v806
    %878 = vmatprep.subr.bf16.mxu0 0
    %879 = vmatpush2.bf16.xpose.msra.mxu0 0
    %880 = vmatprep.subr.bf16.mxu0 0
    %881 = vmatpush2.bf16.xpose.msra.mxu0 0
    %882 = vmatprep.subr.bf16.mxu0 0
    %883 = vmatpush2.bf16.xpose.msra.mxu0 0
    %884 = vmatprep.subr.bf16.mxu0 0
    %885 = vmatpush2.bf16.xpose.msra.mxu0 0
    %886 = vmatprep.subr.bf16.mxu0 0
    %887 = vmatpush2.bf16.xpose.msra.mxu0 0
    %888 = vmatprep.subr.bf16.mxu0 0
    %889 = vmatpush2.bf16.xpose.msra.mxu0 0
    %890 = vmatprep.subr.bf16.mxu0 0
    %891 = vmatpush2.bf16.xpose.msra.mxu0 0
    %892 = vmatprep.subr.bf16.mxu0 0
    %893 = vmatpush2.bf16.xpose.msra.mxu0 0
    %894 = vmatprep.mubr.bf16.mxu0 %v760
    %895 = vmatmul.mubr.bf16.gmra.mxu0 %v759
    %v896 = vpop.f32.mrf.mxu0
    %v897 = vadd.f32 %v857, %v896
    %v898 = vpop.f32.mrf.mxu0
    %v899 = vpop.f32.mrf.mxu0
    %v900 = vpop.f32.mrf.mxu0
    %901 = vdwg.mxu0
    %902 = vmatprep.subr.bf16.mxu0 0
    %903 = vmatpush1.bf16.xpose.msra.mxu0 0
    %904 = vmatprep.subr.bf16.mxu0 0
    %905 = vmatpush1.bf16.xpose.msra.mxu0 0
    %906 = vmatprep.subr.bf16.mxu0 0
    %907 = vmatpush1.bf16.xpose.msra.mxu0 0
    %908 = vmatprep.subr.bf16.mxu0 0
    %909 = vmatpush1.bf16.xpose.msra.mxu0 0
    %910 = vmatprep.subr.bf16.mxu0 0
    %911 = vmatpush1.bf16.xpose.msra.mxu0 0
    %912 = vmatprep.subr.bf16.mxu0 0
    %913 = vmatpush1.bf16.xpose.msra.mxu0 0
    %914 = vmatprep.subr.bf16.mxu0 0
    %915 = vmatpush1.bf16.xpose.msra.mxu0 0
    %916 = vmatprep.subr.bf16.mxu0 %v809
    %917 = vmatpush1.bf16.xpose.msra.mxu0 %v808
    %918 = vmatprep.subr.bf16.mxu0 0
    %919 = vmatpush2.bf16.xpose.msra.mxu0 0
    %920 = vmatprep.subr.bf16.mxu0 0
    %921 = vmatpush2.bf16.xpose.msra.mxu0 0
    %922 = vmatprep.subr.bf16.mxu0 0
    %923 = vmatpush2.bf16.xpose.msra.mxu0 0
    %924 = vmatprep.subr.bf16.mxu0 0
    %925 = vmatpush2.bf16.xpose.msra.mxu0 0
    %926 = vmatprep.subr.bf16.mxu0 0
    %927 = vmatpush2.bf16.xpose.msra.mxu0 0
    %928 = vmatprep.subr.bf16.mxu0 0
    %929 = vmatpush2.bf16.xpose.msra.mxu0 0
    %930 = vmatprep.subr.bf16.mxu0 0
    %931 = vmatpush2.bf16.xpose.msra.mxu0 0
    %932 = vmatprep.subr.bf16.mxu0 0
    %933 = vmatpush2.bf16.xpose.msra.mxu0 0
    %934 = vmatprep.mubr.bf16.mxu0 %v762
    %935 = vmatmul.mubr.bf16.gmra.mxu0 %v761
    %v936 = vpop.f32.mrf.mxu0
    %v937 = vadd.f32 %v897, %v936
    %v938 = vpop.f32.mrf.mxu0
    %v939 = vpop.f32.mrf.mxu0
    %v940 = vpop.f32.mrf.mxu0
    %941 = vdwg.mxu0
    %942 = vmatprep.subr.bf16.mxu0 0
    %943 = vmatpush1.bf16.xpose.msra.mxu0 0
    %944 = vmatprep.subr.bf16.mxu0 0
    %945 = vmatpush1.bf16.xpose.msra.mxu0 0
    %946 = vmatprep.subr.bf16.mxu0 0
    %947 = vmatpush1.bf16.xpose.msra.mxu0 0
    %948 = vmatprep.subr.bf16.mxu0 0
    %949 = vmatpush1.bf16.xpose.msra.mxu0 0
    %950 = vmatprep.subr.bf16.mxu0 0
    %951 = vmatpush1.bf16.xpose.msra.mxu0 0
    %952 = vmatprep.subr.bf16.mxu0 0
    %953 = vmatpush1.bf16.xpose.msra.mxu0 0
    %954 = vmatprep.subr.bf16.mxu0 0
    %955 = vmatpush1.bf16.xpose.msra.mxu0 0
    %956 = vmatprep.subr.bf16.mxu0 %v811
    %957 = vmatpush1.bf16.xpose.msra.mxu0 %v810
    %958 = vmatprep.subr.bf16.mxu0 0
    %959 = vmatpush2.bf16.xpose.msra.mxu0 0
    %960 = vmatprep.subr.bf16.mxu0 0
    %961 = vmatpush2.bf16.xpose.msra.mxu0 0
    %962 = vmatprep.subr.bf16.mxu0 0
    %963 = vmatpush2.bf16.xpose.msra.mxu0 0
    %964 = vmatprep.subr.bf16.mxu0 0
    %965 = vmatpush2.bf16.xpose.msra.mxu0 0
    %966 = vmatprep.subr.bf16.mxu0 0
    %967 = vmatpush2.bf16.xpose.msra.mxu0 0
    %968 = vmatprep.subr.bf16.mxu0 0
    %969 = vmatpush2.bf16.xpose.msra.mxu0 0
    %970 = vmatprep.subr.bf16.mxu0 0
    %971 = vmatpush2.bf16.xpose.msra.mxu0 0
    %972 = vmatprep.subr.bf16.mxu0 0
    %973 = vmatpush2.bf16.xpose.msra.mxu0 0
    %974 = vmatprep.mubr.bf16.mxu0 %v764
    %975 = vmatmul.mubr.bf16.gmra.mxu0 %v763
    %v976 = vpop.f32.mrf.mxu0
    %v977 = vadd.f32 %v937, %v976
    %v978 = vpop.f32.mrf.mxu0
    %v979 = vpop.f32.mrf.mxu0
    %v980 = vpop.f32.mrf.mxu0
    %981 = vdwg.mxu0
    %982 = vmatprep.subr.bf16.mxu0 0
    %983 = vmatpush1.bf16.xpose.msra.mxu0 0
    %984 = vmatprep.subr.bf16.mxu0 0
    %985 = vmatpush1.bf16.xpose.msra.mxu0 0
    %986 = vmatprep.subr.bf16.mxu0 0
    %987 = vmatpush1.bf16.xpose.msra.mxu0 0
    %988 = vmatprep.subr.bf16.mxu0 0
    %989 = vmatpush1.bf16.xpose.msra.mxu0 0
    %990 = vmatprep.subr.bf16.mxu0 0
    %991 = vmatpush1.bf16.xpose.msra.mxu0 0
    %992 = vmatprep.subr.bf16.mxu0 0
    %993 = vmatpush1.bf16.xpose.msra.mxu0 0
    %994 = vmatprep.subr.bf16.mxu0 0
    %995 = vmatpush1.bf16.xpose.msra.mxu0 0
    %996 = vmatprep.subr.bf16.mxu0 0
    %997 = vmatpush1.bf16.xpose.msra.mxu0 %v812
    %998 = vmatprep.subr.bf16.mxu0 0
    %999 = vmatpush2.bf16.xpose.msra.mxu0 0
    %1000 = vmatprep.subr.bf16.mxu0 0
    %1001 = vmatpush2.bf16.xpose.msra.mxu0 0
    %1002 = vmatprep.subr.bf16.mxu0 0
    %1003 = vmatpush2.bf16.xpose.msra.mxu0 0
    %1004 = vmatprep.subr.bf16.mxu0 0
    %1005 = vmatpush2.bf16.xpose.msra.mxu0 0
    %1006 = vmatprep.subr.bf16.mxu0 0
    %1007 = vmatpush2.bf16.xpose.msra.mxu0 0
    %1008 = vmatprep.subr.bf16.mxu0 0
    %1009 = vmatpush2.bf16.xpose.msra.mxu0 0
    %1010 = vmatprep.subr.bf16.mxu0 0
    %1011 = vmatpush2.bf16.xpose.msra.mxu0 0
    %1012 = vmatprep.subr.bf16.mxu0 0
    %1013 = vmatpush2.bf16.xpose.msra.mxu0 0
    %1014 = vmatprep.mubr.bf16.mxu0 0
    %1015 = vmatmul.mubr.bf16.gmra.mxu0 %v765
    %v1016 = vpop.f32.mrf.mxu0
    %v1017 = vadd.f32 %v977, %v1016
    %v1018 = vpop.f32.mrf.mxu0
    %v1019 = vpop.f32.mrf.mxu0
    %v1020 = vpop.f32.mrf.mxu0
    %1021 = vdwg.mxu0
    %v1022 = vld [vmem:[%s2 + $0x2] sm:$0x1]
    %v1023 = vlaneseq
    %v1024 = vshrl.u32 %v1023, 7
    %v1025 = vsub.s32 0, %v1024
    %v1026 = vrot.slane %v1022, %v1025
    %v1027 = vadd.f32 %v1017, %v1026
    %vm1028 = vcmask 74752
    %v1029 = vsel %vm1028, %v1027, -inf
    %1030 = vmax.xlane.f32.xlu0 %v1029
    %v1031 = vpop.xlane.xlu0 %1030
    %v1032 = vsub.f32 %v1027, %v1031
    %v1033 = vmul.f32 %v1032, 1.442695
    %v1034 = vpow.pop %v1033
    %v1035 = vsel %vm1028, %v1034, 0.0
    %1036 = vadd.xlane.f32.xlu0 %v1035
    %v1037 = vpop.xlane.xlu0 %1036
    %v1038 = vrcp.pop %v1037
    %v1039 = vmul.f32 %v1034, %v1038
    %1040 = vst.msk [vmem:[#allocation2] sm:$0x3] %vm1028, %v1039
    // Predicated region
    $region18: #{adv_clf_forward.1} parent=1 // pred_check
      _
    $region19: #{adv_clf_forward.1} parent=1 // pred_check_branch
      %1042 = sbr.rel (0) target = $region21
    $region20: #{adv_clf_forward.1} parent=1 // pred_region
      %s1044 = ssub.s32 32, 32
      %1045 = vsyncadd [#allocation3], %s1044
      %s1047 = sshll.u32 [#allocation2], 4
      %s1048 = int_to_ptr.vmem [resolvable:$true] %s1047
      %1050 = dma.vmem_to_hbm [thread:$0]  %s1048, 32, %s4, [#allocation3]
    $region21: #{adv_clf_forward.1} parent=1 // pred_fallthru
      _
    // Predicated region
    $region22: #{adv_clf_forward.1} parent=1 // pred_check
      _
    $region23: #{adv_clf_forward.1} parent=1 // pred_check_branch
      %1052 = sbr.rel (0) target = $region25
    $region24: #{adv_clf_forward.1} parent=1 // pred_region
      %1053 = dma.done [#allocation3], 32
    $region25: #{adv_clf_forward.1} parent=1 // pred_fallthru
      _
    %1054 = vsyncpa [#allocation3], 1

</llo_original>
